<compile_context>
chip_gen: v7x
topology: tpu7x:2x2x1
jax: 0.10.0
libtpu: 0.0.40
codegen_flags: <defaults>
</compile_context>

<pallas_src>
import functools

import jax
import jax.numpy as jnp
from jax import lax
from jax.experimental import pallas as pl
from jax.experimental.pallas import tpu as pltpu


def mixup_ce_kernel(lamb_ref, y_pred_ref, y_true_ref, y_perm_ref, partial_ref,
                    *, true_batch):
    """One batch tile: partial_ref[...] <- sum over valid rows of
       lse(row) - (lamb*logit[row, y_true] + (1-lamb)*logit[row, y_perm])."""
    i = pl.program_id(0)

    logits = y_pred_ref[...].astype(jnp.float32)          # [TB, C] f32 compute
    TB, C = logits.shape

    # Row-validity mask for the (possibly padded) last tile.
    row = i * TB + lax.broadcasted_iota(jnp.int32, (TB, 1), 0)       # [TB, 1]
    valid = (row < true_batch).astype(jnp.float32)                   # [TB, 1]

    # Numerically-stable log-sum-exp over the class (lane) axis.
    m = jnp.max(logits, axis=-1, keepdims=True)                      # [TB, 1]
    lse = m + jnp.log(jnp.sum(jnp.exp(logits - m), axis=-1, keepdims=True))

    # Fused lamb-weighted target pick (single masked lane-reduction).
    lamb = lamb_ref[0, 0]
    col = lax.broadcasted_iota(jnp.int32, (TB, C), 1)                # [TB, C]
    w = (jnp.where(col == y_true_ref[...], lamb, 0.0)
         + jnp.where(col == y_perm_ref[...], 1.0 - lamb, 0.0))       # [TB, C]
    picked = jnp.sum(w * logits, axis=-1, keepdims=True)             # [TB, 1]

    partial = jnp.sum(valid * (lse - picked))                        # scalar f32
    # Lane-dense write of this block's partial sum (wrapper reads lane 0).
    partial_ref[...] = partial * jnp.ones(partial_ref.shape, jnp.float32)


def _choose_tile_rows(batch, num_classes, itemsize):
    """Pick a batch-tile row count (multiple of 8) whose double-buffered
    logits tile stays well inside every chip's default scoped VMEM."""
    budget_bytes = 4 * 1024 * 1024            # per input buffer (x2 for dbl-buf)
    rows = budget_bytes // max(1, num_classes * itemsize)
    rows = max(8, min(1024, (rows // 8) * 8))
    b_pad8 = max(8, ((batch + 7) // 8) * 8)
    return min(rows, b_pad8)


def mixup_loss(y_pred, y_true, perm_index, lamb):
    """Pallas implementation of MixUp.forward with nn.CrossEntropyLoss()."""
    B, C = y_pred.shape

    # Label permutation (pure integer gather) stays in JAX glue.
    y_perm = jnp.take(y_true, perm_index, axis=0)

    tile_b = _choose_tile_rows(B, C, jnp.dtype(y_pred.dtype).itemsize)
    num_blocks = (B + tile_b - 1) // tile_b
    b_pad = num_blocks * tile_b
    if b_pad != B:
        y_pred = jnp.pad(y_pred, ((0, b_pad - B), (0, 0)))
        y_true = jnp.pad(y_true, (0, b_pad - B))
        y_perm = jnp.pad(y_perm, (0, b_pad - B))

    y_true_2d = y_true.astype(jnp.int32).reshape(b_pad, 1)
    y_perm_2d = y_perm.astype(jnp.int32).reshape(b_pad, 1)
    lamb_arr = jnp.asarray(lamb, jnp.float32).reshape(1, 1)

    kernel = functools.partial(mixup_ce_kernel, true_batch=B)

    partials = pl.pallas_call(
        kernel,
        out_shape=jax.ShapeDtypeStruct((1, num_blocks * 128), jnp.float32),
        grid=(num_blocks,),
        in_specs=[
            # lamb scalar, resident in SMEM for the whole kernel
            pl.BlockSpec(memory_space=pltpu.MemorySpace.SMEM),
            # logits tile, NATIVE dtype (no host up-cast), double-buffered DMA
            pl.BlockSpec((tile_b, C), lambda i: (i, 0)),
            pl.BlockSpec((tile_b, 1), lambda i: (i, 0)),     # y_true
            pl.BlockSpec((tile_b, 1), lambda i: (i, 0)),     # y_true_perm
        ],
        # one lane-dense (1,128) partial-sum slab per grid step -> disjoint
        # output blocks, so the batch axis can be sharded across TCs (v7x).
        out_specs=pl.BlockSpec((1, 128), lambda i: (0, i)),
        compiler_params=pltpu.CompilerParams(
            dimension_semantics=("parallel",)),
    )(lamb_arr, y_pred, y_true_2d, y_perm_2d)

    # Tiny finalize in JAX: sum per-block partials (lane 0 of each slab),
    # single divide by the TRUE batch size.
    psum = jnp.sum(partials.reshape(num_blocks, 128)[:, 0])
    return psum / B


def reference_loss(y_pred, y_true, perm_index, lamb):
    """Pure-JAX reference (PyTorch CrossEntropyLoss, mean reduction)."""
    def ce(logits, labels):
        logp = jax.nn.log_softmax(logits.astype(jnp.float32), axis=-1)
        nll = -jnp.take_along_axis(logp, labels[:, None], axis=-1)[:, 0]
        return jnp.mean(nll)
    y_perm = jnp.take(y_true, perm_index, axis=0)
    lamb = jnp.asarray(lamb, jnp.float32)
    return lamb * ce(y_pred, y_true) + (1.0 - lamb) * ce(y_pred, y_perm)


if __name__ == "__main__":
    key = jax.random.PRNGKey(0)
    k_pred, k_lab, k_lamb, k_perm, k_pred2, k_lab2 = jax.random.split(key, 6)

    alpha = 1.0   # MixUp(alpha=1.0)

    # Case 1: small aligned batch, f32 logits.
    B, C = 8, 32
    y_pred = jax.random.normal(k_pred, (B, C), dtype=jnp.float32)
    y_true = jax.random.randint(k_lab, (B,), 0, C, dtype=jnp.int32)
    # Deterministic stand-ins for the module's encode()-time state:
    #   self.lamb = np.random.beta(alpha, alpha); self.perm_index = randperm(B)
    lamb = jax.random.beta(k_lamb, alpha, alpha)
    perm_index = jax.random.permutation(k_perm, B)

    loss = mixup_loss(y_pred, y_true, perm_index, lamb)
    jax.block_until_ready(loss)
    ref = reference_loss(y_pred, y_true, perm_index, lamb)
    assert jnp.allclose(loss, ref, rtol=1e-5, atol=1e-5), (loss, ref)

    # Case 2: ragged batch (exercises padded-row masking), bf16 logits
    # DMA'd in native dtype (no host up-cast).
    B2, C2 = 20, 40
    y_pred2 = jax.random.normal(k_pred2, (B2, C2), dtype=jnp.float32)
    y_true2 = jax.random.randint(k_lab2, (B2,), 0, C2, dtype=jnp.int32)
    perm_index2 = jax.random.permutation(k_perm, B2)

    loss2 = mixup_loss(y_pred2.astype(jnp.bfloat16), y_true2, perm_index2, lamb)
    jax.block_until_ready(loss2)
    ref2 = reference_loss(y_pred2.astype(jnp.bfloat16), y_true2, perm_index2, lamb)
    assert jnp.allclose(loss2, ref2, rtol=5e-3, atol=5e-3), (loss2, ref2)

    print("KERNEL_OK")
</pallas_src>

<mosaic_0001>
module attributes {stable_mosaic.version = 11 : i64} {
  func.func @mixup_ce_kernel(%arg0: i32, %arg1: memref<1x1xf32, #tpu.memory_space<smem>>, %arg2: memref<8x32xf32, #tpu.memory_space<vmem>>, %arg3: memref<8x1xi32, #tpu.memory_space<vmem>>, %arg4: memref<8x1xi32, #tpu.memory_space<vmem>>, %arg5: memref<1x128xf32, #tpu.memory_space<vmem>>) attributes {dimension_semantics = [#tpu.dimension_semantics<parallel>], iteration_bounds = array<i64: 1>, scalar_prefetch = 0 : i64, scratch_operands = 0 : i64, tpu.core_type = #tpu.core_type<tc>, window_params = [{transform_indices = @transform_0, window_bounds = array<i64: 1, 1>}, {transform_indices = @transform_1, window_bounds = array<i64: 8, 32>}, {transform_indices = @transform_2, window_bounds = array<i64: 8, 1>}, {transform_indices = @transform_3, window_bounds = array<i64: 8, 1>}, {transform_indices = @transform_4, window_bounds = array<i64: 1, 128>}]} {
    %c0 = arith.constant 0 : index
    %c0_0 = arith.constant 0 : index
    %0 = vector.load %arg2[%c0, %c0_0] : memref<8x32xf32, #tpu.memory_space<vmem>>, vector<8x32xf32>
    %c8_i32 = arith.constant 8 : i32
    %1 = arith.muli %arg0, %c8_i32 : i32
    %2 = tpu.iota {dimensions = array<i32: 0>} : vector<8x1xi32>
    %3 = vector.broadcast %1 : i32 to vector<8x1xi32>
    %4 = arith.addi %3, %2 : vector<8x1xi32>
    %c8_i32_1 = arith.constant 8 : i32
    %5 = vector.broadcast %c8_i32_1 : i32 to vector<8x1xi32>
    %6 = arith.cmpi slt, %4, %5 : vector<8x1xi32>
    %7 = arith.extui %6 : vector<8x1xi1> to vector<8x1xi32>
    %8 = arith.sitofp %7 : vector<8x1xi32> to vector<8x1xf32>
    %cst = arith.constant dense<0xFF800000> : vector<8xf32>
    %9 = vector.multi_reduction <maximumf>, %0, %cst [1] : vector<8x32xf32> to vector<8xf32>
    %10 = vector.shape_cast %9 : vector<8xf32> to vector<8x1xf32>
    %11 = vector.broadcast %10 : vector<8x1xf32> to vector<8x32xf32>
    %12 = arith.subf %0, %11 : vector<8x32xf32>
    %13 = math.exp %12 : vector<8x32xf32>
    %cst_2 = arith.constant dense<0.000000e+00> : vector<8xf32>
    %14 = vector.multi_reduction <add>, %13, %cst_2 [1] : vector<8x32xf32> to vector<8xf32>
    %15 = vector.shape_cast %14 : vector<8xf32> to vector<8x1xf32>
    %16 = math.log %15 : vector<8x1xf32>
    %17 = arith.addf %10, %16 : vector<8x1xf32>
    %c0_3 = arith.constant 0 : index
    %c0_4 = arith.constant 0 : index
    %18 = memref.load %arg1[%c0_3, %c0_4] : memref<1x1xf32, #tpu.memory_space<smem>>
    %19 = tpu.iota {dimensions = array<i32: 1>} : vector<8x32xi32>
    %c0_5 = arith.constant 0 : index
    %c0_6 = arith.constant 0 : index
    %20 = vector.load %arg3[%c0_5, %c0_6] : memref<8x1xi32, #tpu.memory_space<vmem>>, vector<8x1xi32>
    %21 = vector.broadcast %20 : vector<8x1xi32> to vector<8x32xi32>
    %22 = arith.cmpi eq, %19, %21 : vector<8x32xi32>
    %cst_7 = arith.constant 0.000000e+00 : f32
    %23 = vector.broadcast %18 : f32 to vector<8x32xf32>
    %24 = vector.broadcast %cst_7 : f32 to vector<8x32xf32>
    %25 = arith.select %22, %23, %24 : vector<8x32xi1>, vector<8x32xf32>
    %c0_8 = arith.constant 0 : index
    %c0_9 = arith.constant 0 : index
    %26 = vector.load %arg4[%c0_8, %c0_9] : memref<8x1xi32, #tpu.memory_space<vmem>>, vector<8x1xi32>
    %27 = vector.broadcast %26 : vector<8x1xi32> to vector<8x32xi32>
    %28 = arith.cmpi eq, %19, %27 : vector<8x32xi32>
    %cst_10 = arith.constant 1.000000e+00 : f32
    %29 = arith.subf %cst_10, %18 : f32
    %cst_11 = arith.constant 0.000000e+00 : f32
    %30 = vector.broadcast %29 : f32 to vector<8x32xf32>
    %31 = vector.broadcast %cst_11 : f32 to vector<8x32xf32>
    %32 = arith.select %28, %30, %31 : vector<8x32xi1>, vector<8x32xf32>
    %33 = arith.addf %25, %32 : vector<8x32xf32>
    %34 = arith.mulf %33, %0 : vector<8x32xf32>
    %cst_12 = arith.constant dense<0.000000e+00> : vector<8xf32>
    %35 = vector.multi_reduction <add>, %34, %cst_12 [1] : vector<8x32xf32> to vector<8xf32>
    %36 = vector.shape_cast %35 : vector<8xf32> to vector<8x1xf32>
    %37 = arith.subf %17, %36 : vector<8x1xf32>
    %38 = arith.mulf %8, %37 : vector<8x1xf32>
    %39 = vector.shape_cast %38 : vector<8x1xf32> to vector<1x8x1xf32>
    %cst_13 = arith.constant dense<0.000000e+00> : vector<1xf32>
    %40 = vector.multi_reduction <add>, %39, %cst_13 [1, 2] : vector<1x8x1xf32> to vector<1xf32>
    %41 = vector.shape_cast %40 : vector<1xf32> to vector<1x1x1xf32>
    %42 = vector.extract %41[0, 0, 0] : f32 from vector<1x1x1xf32>
    %cst_14 = arith.constant 1.000000e+00 : f32
    %43 = vector.broadcast %cst_14 : f32 to vector<1x128xf32>
    %44 = vector.broadcast %42 : f32 to vector<1x128xf32>
    %45 = arith.mulf %44, %43 : vector<1x128xf32>
    %c0_15 = arith.constant 0 : index
    %c0_16 = arith.constant 0 : index
    %46 = vector.load %arg5[%c0_15, %c0_16] : memref<1x128xf32, #tpu.memory_space<vmem>>, vector<1x128xf32>
    tpu.vector_store %arg5[%c0_15, %c0_16], %45 {strides = array<i32>} : memref<1x128xf32, #tpu.memory_space<vmem>>, vector<1x128xf32>,
    return
  }
  func.func @transform_0(%arg0: i32) -> (i32, i32) {
    %c0_i32 = arith.constant 0 : i32
    %c0_i32_0 = arith.constant 0 : i32
    %c0_i32_1 = arith.constant 0 : i32
    return %c0_i32, %c0_i32_0 : i32, i32
  }
  func.func @transform_1(%arg0: i32) -> (i32, i32) {
    %c0_i32 = arith.constant 0 : i32
    %c0_i32_0 = arith.constant 0 : i32
    return %arg0, %c0_i32 : i32, i32
  }
  func.func @transform_2(%arg0: i32) -> (i32, i32) {
    %c0_i32 = arith.constant 0 : i32
    %c0_i32_0 = arith.constant 0 : i32
    return %arg0, %c0_i32 : i32, i32
  }
  func.func @transform_3(%arg0: i32) -> (i32, i32) {
    %c0_i32 = arith.constant 0 : i32
    %c0_i32_0 = arith.constant 0 : i32
    return %arg0, %c0_i32 : i32, i32
  }
  func.func @transform_4(%arg0: i32) -> (i32, i32) {
    %c0_i32 = arith.constant 0 : i32
    %c0_i32_0 = arith.constant 0 : i32
    return %c0_i32, %arg0 : i32, i32
  }
}

</mosaic_0001>

<llo_original>
// kernel: tpu_custom_call.1
$region0: #{tpu_custom_call.1}
  #allocation0 [shape = 'u32[]', space=smem, size = 0x4, offset = 0x4, fixed_abs, tag = 'smem constant byte address 0x4 - core index']
  #allocation1 [shape = 'u32[144,128]{1,0:T(1,128)}', space=vmem, size = 0x12000, scoped, tag = 'internal scratch']
  #allocation2 [shape = 'f32[1,1]{1,0:T(1,128)S(6)}', space=smem, size = 0x200, scoped, tag = 'scoped memory for tpu_custom_call.1']
  %s0 = inlined_call_operand.<no memory space> [shape: f32[1,1], index: 0, kind: input, shape index: {}]
  %s1 = inlined_call_operand.vmem [shape: f32[8,32], index: 1, kind: input, shape index: {}]
  %s2 = inlined_call_operand.vmem [shape: s32[8,1], index: 2, kind: input, shape index: {}]
  %s3 = inlined_call_operand.vmem [shape: s32[8,1], index: 3, kind: input, shape index: {}]
  %s4 = inlined_call_operand.hbm [shape: f32[1,128], index: 4, kind: output, shape index: {}]
  %s5 = sld [smem:[#allocation0]]
  $region26: #{tpu_custom_call.1} parent=0
    _
  %s7 = ssub.s32 1, %s5
  %s8 = scalar_select 0, %s7, %s5
  %9 = sst [smem:[#allocation2]] %s0
  $region1: #{tpu_custom_call.1} parent=0
    #allocation3 [shape = 'u8[512]{0}', space=vmem, size = 0x400, scoped, tag = 'output window, operand 0, single buffered']
    #allocation4 [shape = 's32[1]{0}', space=sflag, size = 0x4, scoped, tag = 'scoped memory for tpu_custom_call.1']
    %10 = vsyncpa [#allocation4], 0
    // Predicated region
    $region2: #{tpu_custom_call.1} parent=1 // pred_check
      _
    $region3: #{tpu_custom_call.1} parent=1 // pred_check_branch
      %12 = sbr.rel (0) target = $region5
    $region4: #{tpu_custom_call.1} parent=1 // pred_region
      _
    $region5: #{tpu_custom_call.1} parent=1 // pred_fallthru
      _
    // Predicated region
    $region6: #{tpu_custom_call.1} parent=1 // pred_check
      _
    $region7: #{tpu_custom_call.1} parent=1 // pred_check_branch
      %14 = sbr.rel (0) target = $region9
    $region8: #{tpu_custom_call.1} parent=1 // pred_region
      _
    $region9: #{tpu_custom_call.1} parent=1 // pred_fallthru
      _
    // Predicated region
    $region10: #{tpu_custom_call.1} parent=1 // pred_check
      _
    $region11: #{tpu_custom_call.1} parent=1 // pred_check_branch
      %16 = sbr.rel (0) target = $region13
    $region12: #{tpu_custom_call.1} parent=1 // pred_region
      _
    $region13: #{tpu_custom_call.1} parent=1 // pred_fallthru
      _
    // Predicated region
    $region14: #{tpu_custom_call.1} parent=1 // pred_check
      _
    $region15: #{tpu_custom_call.1} parent=1 // pred_check_branch
      %18 = sbr.rel (0) target = $region17
    $region16: #{tpu_custom_call.1} parent=1 // pred_region
      _
    $region17: #{tpu_custom_call.1} parent=1 // pred_fallthru
      _
    %v19 = vld [vmem:[%s1] sm:$0xff]
    %s20 = smul.u32 0, 8
    %v21 = vlaneseq
    %v22 = vshrl.u32 %v21, 7
    %v23 = vstv %s20
    %v24 = vadd.s32 %v23, %v22
    %vm25 = vcmp.lt.s32.totalorder %v24, 8
    %v26 = vsel %vm25, 1, 0
    %v27 = vcvt.s32.f32 %v26
    %vm28 = vcmask 261120
    %v29 = vsel %vm28, %v19, -inf
    %30 = vmax.xlane.f32.xlu0 %v29
    %v31 = vpop.xlane.xlu0 %30
    %v32 = vsub.f32 %v19, %v31
    %v33 = vmul.f32 %v32, 1.442695
    %v34 = vpow.pop %v33
    %v35 = vsel %vm28, %v34, 0.0
    %36 = vadd.xlane.f32.xlu0 %v35
    %v37 = vpop.xlane.xlu0 %36
    %v38 = vlog2.pop %v37
    %v39 = vmul.f32 %v38, 0.6931472
    %v40 = vadd.f32 %v31, %v39
    %s41 = sld [smem:[#allocation2]]
    %v42 = vlaneseq
    %v43 = vand.u32 %v42, 127
    %v44 = vld [vmem:[%s2] sm:$0xff]
    %45 = vset.pattern.permute.xlu0 0
    %46 = vperm.xlu0 %45, %v44
    %v47 = vpop.permute.xlu0 %46
    %vm48 = vcmp.eq.s32.totalorder %v43, %v47
    %v49 = vstv %s41
    %v50 = vsel %vm48, %v49, 0.0
    %v51 = vld [vmem:[%s3] sm:$0xff]
    %52 = vset.pattern.permute.xlu0 0
    %53 = vperm.xlu0 %52, %v51
    %v54 = vpop.permute.xlu0 %53
    %vm55 = vcmp.eq.s32.totalorder %v43, %v54
    %s56 = ssub.f32 1.0, %s41
    %v57 = vstv %s56
    %v58 = vsel %vm55, %v57, 0.0
    %v59 = vadd.f32 %v50, %v58
    %v60 = vmul.f32 %v59, %v19
    %v61 = vsel %vm28, %v60, 0.0
    %62 = vadd.xlane.f32.xlu0 %v61
    %v63 = vpop.xlane.xlu0 %62
    %v64 = vsub.f32 %v40, %v63
    %v65 = vmul.f32 %v27, %v64
    %vm66 = vcmask 7168
    %v67 = vsel %vm66, %v65, 0.0
    %68 = vadd.xlane.f32.xlu0 %v67
    %v69 = vpop.xlane.xlu0 %68
    %v70 = vrot.slane %v69, 4
    %v71 = vadd.f32 %v69, %v70
    %v72 = vrot.slane %v71, 2
    %v73 = vadd.f32 %v71, %v72
    %v74 = vrot.slane %v73, 1
    %v75 = vadd.f32 %v73, %v74
    %s76 = vtos %v75
    %v77 = vstv %s76
    %78 = vst [vmem:[#allocation3] sm:$0x1] %v77
    // Predicated region
    $region18: #{tpu_custom_call.1} parent=1 // pred_check
      _
    $region19: #{tpu_custom_call.1} parent=1 // pred_check_branch
      %80 = sbr.rel (0) target = $region21
    $region20: #{tpu_custom_call.1} parent=1 // pred_region
      %s82 = ssub.s32 16, 16
      %83 = vsyncadd [#allocation4], %s82
      %s85 = sshll.u32 [#allocation3], 4
      %s86 = int_to_ptr.vmem [resolvable:$true] %s85
      %88 = dma.vmem_to_hbm [thread:$0]  %s86, 16, %s4, [#allocation4]
    $region21: #{tpu_custom_call.1} parent=1 // pred_fallthru
      _
    // Predicated region
    $region22: #{tpu_custom_call.1} parent=1 // pred_check
      _
    $region23: #{tpu_custom_call.1} parent=1 // pred_check_branch
      %90 = sbr.rel (0) target = $region25
    $region24: #{tpu_custom_call.1} parent=1 // pred_region
      %91 = dma.done [#allocation4], 16
    $region25: #{tpu_custom_call.1} parent=1 // pred_fallthru
      _
    %92 = vsyncpa [#allocation4], 1

</llo_original>
